<compile_context>
chip_gen: v6e
topology: v6e:2x2x1
jax: 0.10.0
libtpu: 0.0.40
codegen_flags: <defaults>
</compile_context>

<pallas_src>
import jax
import jax.numpy as jnp
from jax.experimental import pallas as pl
from jax.experimental.pallas import tpu as pltpu


# -----------------------------------------------------------------------------
# Kernel
# -----------------------------------------------------------------------------
def fusion_kernel(p_ref, im_ref,
                  wpa_ref, bp_ref,      # [ptoi ; conv2-point-half] stacked: (Ci+O, Cp), (Ci, 1)
                  wi_ref, bi_ref,       # itoi:  (Ci, Ci), (Ci, 1)
                  wc1_ref, bc1_ref,     # conv1 + BN1 folded: (Cp, Ci), (Cp, 1)
                  wc2b_ref, bc2_ref,    # conv2 + BN2 folded, fuse half: (O, Cp), (O, 1)
                  out_ref):
    ci = bp_ref.shape[0]
    p = p_ref[0]       # (Cp, Nt)  io dtype (bf16/f32), fed straight to the MXU
    im = im_ref[0]     # (Ci, Nt)

    # ---- ptoi and the point-half of conv2 share RHS p: one stacked matmul.
    stk = jnp.dot(wpa_ref[...], p, preferred_element_type=jnp.float32)  # (Ci+O, Nt) f32
    pf = stk[:ci] + bp_ref[...]     # ptoi pre-norm features  (Ci, Nt)
    o_pt = stk[ci:]                 # conv2(point_features) partial  (O, Nt)

    # ---- itoi
    imf = jnp.dot(wi_ref[...], im, preferred_element_type=jnp.float32) + bi_ref[...]

    # ---- 3 channel (sublane) reductions instead of 5; everything else is (1, Nt)
    p_sq = jnp.sum(pf * pf, axis=0, keepdims=True)
    i_sq = jnp.sum(imf * imf, axis=0, keepdims=True)
    d_pi = jnp.sum(pf * imf, axis=0, keepdims=True)

    p_norm = jnp.sqrt(p_sq)
    i_norm = jnp.sqrt(i_sq)
    inv_p = 1.0 / (p_norm + 1e-8)          # (1, Nt) reciprocals, not (Ci, Nt) divides
    inv_i = 1.0 / (i_norm + 1e-8)

    # CosineSimilarity on the normalized features:
    #   cos = <pf_n, imf_n> / max(||pf_n||*||imf_n||, 1e-8), pf_n = pf*inv_p, ...
    nn = (p_norm * inv_p) * (i_norm * inv_i)
    cos = d_pi * inv_p * inv_i / jnp.maximum(nn, 1e-8)      # (1, Nt)

    # fuse_p = pf_n + cos*imf_n  ==  pf*inv_p + (cos*inv_i)*imf   (no pf_n/imf_n tiles)
    fuse = pf * inv_p + (cos * inv_i) * imf                  # (Ci, Nt) f32

    # ---- conv1 (Ci -> Cp) with BN1 folded, ReLU
    h = jnp.dot(wc1_ref[...], fuse.astype(wc1_ref.dtype),
                preferred_element_type=jnp.float32) + bc1_ref[...]
    h = jnp.maximum(h, 0.0)                                  # (Cp, Nt)

    # ---- conv2 on concat([point, fuse_p]) == o_pt + Wc2b @ h, BN2 folded, ReLU
    o = o_pt + jnp.dot(wc2b_ref[...], h.astype(wc2b_ref.dtype),
                       preferred_element_type=jnp.float32) + bc2_ref[...]
    o = jnp.maximum(o, 0.0)                                  # (O, Nt)
    out_ref[0] = o.astype(out_ref.dtype)


# -----------------------------------------------------------------------------
# Wrapper
# -----------------------------------------------------------------------------
def _pick_n_tile(n, target, batch):
    """Lane-dense tile width along N: multiple of 128, <= target, and when
    batch == 1 small enough that the grid still has >= 2 blocks (v7x megacore)."""
    if n <= 128:
        return n
    nt = min((target // 128) * 128, (n // 128) * 128)
    nt = max(nt, 128)
    if batch == 1 and pl.cdiv(n, nt) < 2:
        nt = max(128, pl.cdiv(pl.cdiv(n, 2), 128) * 128)
    return nt


def similiar_fusion_conv(point_features, img_features, kparams, *,
                         n_tile=1024, io_dtype=jnp.bfloat16):
    """point_features: (B, Cp, N); img_features: (B, Ci, N) -> (B, O, N) in io_dtype."""
    B, Cp, N = point_features.shape
    Ci = img_features.shape[1]
    O = kparams["bc2"].shape[0]

    io_dtype = jnp.dtype(io_dtype)
    point_features = point_features.astype(io_dtype)
    img_features = img_features.astype(io_dtype)

    # Matmul weights travel in io_dtype (native bf16 MXU path); biases stay f32.
    mm_keys = ("wpa", "wi", "wc1", "wc2b")
    param_order = ["wpa", "bp", "wi", "bi", "wc1", "bc1", "wc2b", "bc2"]
    param_arrays = [kparams[k].astype(io_dtype) if k in mm_keys
                    else kparams[k].astype(jnp.float32) for k in param_order]

    nt = _pick_n_tile(N, n_tile, B)
    nb = pl.cdiv(N, nt)

    # Larger parallel extent first so v7x core sharding always sees >= 2 blocks.
    if nb >= B:
        grid = (nb, B)
        data_map = lambda n, b: (b, 0, n)
    else:
        grid = (B, nb)
        data_map = lambda b, n: (b, 0, n)

    def const_spec(arr):
        nd = arr.ndim
        return pl.BlockSpec(arr.shape, lambda i, j, _nd=nd: (0,) * _nd)

    itemsize = io_dtype.itemsize
    cost = pl.CostEstimate(
        flops=int(2 * B * N * (Cp * (Ci + O) + Ci * Ci + Ci * Cp + Cp * O)
                  + 10 * B * N * Ci),
        transcendentals=int(5 * B * N),
        bytes_accessed=int(B * (Cp + Ci + O) * N * itemsize),
    )

    out = pl.pallas_call(
        fusion_kernel,
        out_shape=jax.ShapeDtypeStruct((B, O, N), io_dtype),
        grid=grid,
        in_specs=[
            pl.BlockSpec((1, Cp, nt), data_map),
            pl.BlockSpec((1, Ci, nt), data_map),
        ] + [const_spec(a) for a in param_arrays],
        out_specs=pl.BlockSpec((1, O, nt), data_map),
        compiler_params=pltpu.CompilerParams(
            dimension_semantics=("parallel", "parallel"),
            vmem_limit_bytes=32 * 1024 * 1024,
        ),
        cost_estimate=cost,
    )(point_features, img_features, *param_arrays)
    return out


# -----------------------------------------------------------------------------
# Parameters (raw, PyTorch-shaped) + folding into kernel form
# -----------------------------------------------------------------------------
def init_raw_params(key, point_channels, img_channels, outplanes):
    """Synthetic parameters matching the nn.Module: Conv1d weights stored as
    (Cout, Cin) (kernel-size-1 axis squeezed), biases (Cout,), BN params (C,)."""
    ks = jax.random.split(key, 16)

    def conv_w(k, cout, cin):
        return (0.1 * jax.random.normal(k, (cout, cin))).astype(jnp.float32)

    def conv_b(k, cout):
        return (0.1 * jax.random.normal(k, (cout,))).astype(jnp.float32)

    def bn_params(k, c):
        k1, k2, k3, k4 = jax.random.split(k, 4)
        gamma = (1.0 + 0.1 * jax.random.normal(k1, (c,))).astype(jnp.float32)
        beta = (0.1 * jax.random.normal(k2, (c,))).astype(jnp.float32)
        mean = (0.1 * jax.random.normal(k3, (c,))).astype(jnp.float32)
        var = (0.5 + 0.2 * jax.random.uniform(k4, (c,))).astype(jnp.float32)
        return gamma, beta, mean, var

    g1, b1, m1, v1 = bn_params(ks[8], point_channels)
    g2, b2, m2, v2 = bn_params(ks[9], outplanes)

    return {
        "wp": conv_w(ks[0], img_channels, point_channels),
        "bp": conv_b(ks[1], img_channels),
        "wi": conv_w(ks[2], img_channels, img_channels),
        "bi": conv_b(ks[3], img_channels),
        "wc1": conv_w(ks[4], point_channels, img_channels),
        "bc1": conv_b(ks[5], point_channels),
        "g1": g1, "b1": b1, "m1": m1, "v1": v1,
        "wc2": conv_w(ks[6], outplanes, 2 * point_channels),
        "bc2": conv_b(ks[7], outplanes),
        "g2": g2, "b2": b2, "m2": m2, "v2": v2,
    }


def fold_params(rp, eps=1e-5):
    """Fold eval-mode BatchNorm into conv weights/biases, split conv2's weight,
    and stack the point-half of conv2 on top of the ptoi weight (shared RHS)."""
    s1 = rp["g1"] / jnp.sqrt(rp["v1"] + eps)
    t1 = rp["b1"] - rp["m1"] * s1
    s2 = rp["g2"] / jnp.sqrt(rp["v2"] + eps)
    t2 = rp["b2"] - rp["m2"] * s2

    Cp = rp["wc1"].shape[0]
    wc1f = rp["wc1"] * s1[:, None]
    bc1f = rp["bc1"] * s1 + t1
    wc2f = rp["wc2"] * s2[:, None]
    bc2f = rp["bc2"] * s2 + t2

    return {
        "wpa": jnp.concatenate([rp["wp"], wc2f[:, :Cp]], axis=0),  # (Ci+O, Cp)
        "bp": rp["bp"][:, None],
        "wi": rp["wi"], "bi": rp["bi"][:, None],
        "wc1": wc1f, "bc1": bc1f[:, None],
        "wc2b": wc2f[:, Cp:],       # multiplies fuse_p (post conv1)
        "bc2": bc2f[:, None],
    }


# -----------------------------------------------------------------------------
# Pure-JAX reference (channels-first, faithful to the PyTorch module, eval BN)
# -----------------------------------------------------------------------------
def reference_jax(point, img, rp, eps=1e-5):
    def conv1x1(x, w, b):  # x: (B,Cin,N), w: (Cout,Cin), b: (Cout,)
        return jnp.einsum("oc,bcn->bon", w, x) + b[None, :, None]

    def bn(x, g, bta, m, v):
        return (g[None, :, None] * (x - m[None, :, None])
                / jnp.sqrt(v[None, :, None] + eps) + bta[None, :, None])

    pf = conv1x1(point, rp["wp"], rp["bp"])
    pf = pf / (jnp.linalg.norm(pf, axis=1, keepdims=True) + 1e-8)
    imf = conv1x1(img, rp["wi"], rp["bi"])
    imf = imf / (jnp.linalg.norm(imf, axis=1, keepdims=True) + 1e-8)
    cos = jnp.sum(pf * imf, axis=1, keepdims=True) / jnp.maximum(
        jnp.linalg.norm(pf, axis=1, keepdims=True)
        * jnp.linalg.norm(imf, axis=1, keepdims=True), 1e-8)
    fuse = pf + cos * imf
    h = jnp.maximum(bn(conv1x1(fuse, rp["wc1"], rp["bc1"]),
                       rp["g1"], rp["b1"], rp["m1"], rp["v1"]), 0.0)
    cat = jnp.concatenate([point, h], axis=1)
    o = jnp.maximum(bn(conv1x1(cat, rp["wc2"], rp["bc2"]),
                       rp["g2"], rp["b2"], rp["m2"], rp["v2"]), 0.0)
    return o


# -----------------------------------------------------------------------------
if __name__ == "__main__":
    B, Cp, Ci, O, N = 2, 8, 16, 32, 256

    key = jax.random.PRNGKey(0)
    k_pt, k_im, k_params = jax.random.split(key, 3)
    point = jax.random.normal(k_pt, (B, Cp, N), dtype=jnp.float32)
    img = jax.random.normal(k_im, (B, Ci, N), dtype=jnp.float32)

    raw_params = init_raw_params(k_params, Cp, Ci, O)
    kparams = fold_params(raw_params)
    ref = jax.block_until_ready(reference_jax(point, img, raw_params))

    # f32 IO path -> strict check against the pure-JAX reference.
    out_f32 = jax.block_until_ready(
        similiar_fusion_conv(point, img, kparams, io_dtype=jnp.float32))
    assert out_f32.shape == (B, O, N)
    assert jnp.allclose(out_f32, ref, atol=1e-3, rtol=1e-3), \
        float(jnp.max(jnp.abs(out_f32 - ref)))

    # Default path: bf16 IO + bf16 matmul weights (HBM-bound kernel -> ~2x fewer
    # bytes); f32 accumulation inside. Relaxed tolerance vs the f32 reference.
    out_bf16 = jax.block_until_ready(similiar_fusion_conv(point, img, kparams))
    assert out_bf16.shape == (B, O, N) and out_bf16.dtype == jnp.bfloat16
    assert jnp.allclose(out_bf16.astype(jnp.float32), ref, atol=1e-1, rtol=1e-1)

    # Non-divisible N (exercises the cdiv grid / padded edge block) with B=1
    # (exercises the >=2-blocks guard used for v7x megacore sharding).
    N2 = 320
    point2 = jax.random.normal(k_pt, (1, Cp, N2), dtype=jnp.float32)
    img2 = jax.random.normal(k_im, (1, Ci, N2), dtype=jnp.float32)
    out2 = jax.block_until_ready(
        similiar_fusion_conv(point2, img2, kparams, io_dtype=jnp.float32))
    ref2 = reference_jax(point2, img2, raw_params)
    assert out2.shape == (1, O, N2)
    assert jnp.allclose(out2, ref2, atol=1e-3, rtol=1e-3)

    print("KERNEL_OK")
</pallas_src>

<mosaic_0001>
module attributes {stable_mosaic.version = 11 : i64} {
  func.func @fusion_kernel(%arg0: i32, %arg1: i32, %arg2: memref<1x8x256xf32, #tpu.memory_space<vmem>>, %arg3: memref<1x16x256xf32, #tpu.memory_space<vmem>>, %arg4: memref<48x8xf32, #tpu.memory_space<vmem>>, %arg5: memref<16x1xf32, #tpu.memory_space<vmem>>, %arg6: memref<16x16xf32, #tpu.memory_space<vmem>>, %arg7: memref<16x1xf32, #tpu.memory_space<vmem>>, %arg8: memref<8x16xf32, #tpu.memory_space<vmem>>, %arg9: memref<8x1xf32, #tpu.memory_space<vmem>>, %arg10: memref<32x8xf32, #tpu.memory_space<vmem>>, %arg11: memref<32x1xf32, #tpu.memory_space<vmem>>, %arg12: memref<1x32x256xf32, #tpu.memory_space<vmem>>) attributes {dimension_semantics = [#tpu.dimension_semantics<parallel>, #tpu.dimension_semantics<parallel>], iteration_bounds = array<i64: 2, 1>, scalar_prefetch = 0 : i64, scratch_operands = 0 : i64, tpu.core_type = #tpu.core_type<tc>, window_params = [{transform_indices = @transform_0, window_bounds = array<i64: 1, 8, 256>}, {transform_indices = @transform_1, window_bounds = array<i64: 1, 16, 256>}, {pipeline_mode = #tpu.pipeline_mode<synchronous>, transform_indices = @transform_2, window_bounds = array<i64: 48, 8>}, {pipeline_mode = #tpu.pipeline_mode<synchronous>, transform_indices = @transform_3, window_bounds = array<i64: 16, 1>}, {pipeline_mode = #tpu.pipeline_mode<synchronous>, transform_indices = @transform_4, window_bounds = array<i64: 16, 16>}, {pipeline_mode = #tpu.pipeline_mode<synchronous>, transform_indices = @transform_5, window_bounds = array<i64: 16, 1>}, {pipeline_mode = #tpu.pipeline_mode<synchronous>, transform_indices = @transform_6, window_bounds = array<i64: 8, 16>}, {pipeline_mode = #tpu.pipeline_mode<synchronous>, transform_indices = @transform_7, window_bounds = array<i64: 8, 1>}, {pipeline_mode = #tpu.pipeline_mode<synchronous>, transform_indices = @transform_8, window_bounds = array<i64: 32, 8>}, {pipeline_mode = #tpu.pipeline_mode<synchronous>, transform_indices = @transform_9, window_bounds = array<i64: 32, 1>}, {transform_indices = @transform_10, window_bounds = array<i64: 1, 32, 256>}]} {
    %c0 = arith.constant 0 : index
    %c0_0 = arith.constant 0 : index
    %c0_1 = arith.constant 0 : index
    %0 = vector.load %arg2[%c0, %c0_0, %c0_1] : memref<1x8x256xf32, #tpu.memory_space<vmem>>, vector<1x8x256xf32>
    %1 = vector.shape_cast %0 : vector<1x8x256xf32> to vector<8x256xf32>
    %c0_2 = arith.constant 0 : index
    %c0_3 = arith.constant 0 : index
    %c0_4 = arith.constant 0 : index
    %2 = vector.load %arg3[%c0_2, %c0_3, %c0_4] : memref<1x16x256xf32, #tpu.memory_space<vmem>>, vector<1x16x256xf32>
    %3 = vector.shape_cast %2 : vector<1x16x256xf32> to vector<16x256xf32>
    %c0_5 = arith.constant 0 : index
    %c0_6 = arith.constant 0 : index
    %4 = vector.load %arg4[%c0_5, %c0_6] : memref<48x8xf32, #tpu.memory_space<vmem>>, vector<48x8xf32>
    %cst = arith.constant dense<0.000000e+00> : vector<48x256xf32>
    %5 = tpu.matmul %4, %1, %cst {dimension_numbers = #tpu.dot_dimension_numbers<[1], [0], [0], [1], [0, 0, 1, 1], [], []>} : vector<48x8xf32>, vector<8x256xf32>, vector<48x256xf32> -> vector<48x256xf32>
    %6 = vector.extract_strided_slice %5 {offsets = [0, 0], sizes = [16, 256], strides = [1, 1]} : vector<48x256xf32> to vector<16x256xf32>
    %c0_7 = arith.constant 0 : index
    %c0_8 = arith.constant 0 : index
    %7 = vector.load %arg5[%c0_7, %c0_8] : memref<16x1xf32, #tpu.memory_space<vmem>>, vector<16x1xf32>
    %8 = vector.broadcast %7 : vector<16x1xf32> to vector<16x256xf32>
    %9 = arith.addf %6, %8 : vector<16x256xf32>
    %10 = vector.extract_strided_slice %5 {offsets = [16, 0], sizes = [32, 256], strides = [1, 1]} : vector<48x256xf32> to vector<32x256xf32>
    %c0_9 = arith.constant 0 : index
    %c0_10 = arith.constant 0 : index
    %11 = vector.load %arg6[%c0_9, %c0_10] : memref<16x16xf32, #tpu.memory_space<vmem>>, vector<16x16xf32>
    %cst_11 = arith.constant dense<0.000000e+00> : vector<16x256xf32>
    %12 = tpu.matmul %11, %3, %cst_11 {dimension_numbers = #tpu.dot_dimension_numbers<[1], [0], [0], [1], [0, 0, 1, 1], [], []>} : vector<16x16xf32>, vector<16x256xf32>, vector<16x256xf32> -> vector<16x256xf32>
    %c0_12 = arith.constant 0 : index
    %c0_13 = arith.constant 0 : index
    %13 = vector.load %arg7[%c0_12, %c0_13] : memref<16x1xf32, #tpu.memory_space<vmem>>, vector<16x1xf32>
    %14 = vector.broadcast %13 : vector<16x1xf32> to vector<16x256xf32>
    %15 = arith.addf %12, %14 : vector<16x256xf32>
    %16 = arith.mulf %9, %9 : vector<16x256xf32>
    %cst_14 = arith.constant dense<0.000000e+00> : vector<256xf32>
    %17 = vector.multi_reduction <add>, %16, %cst_14 [0] : vector<16x256xf32> to vector<256xf32>
    %18 = vector.shape_cast %17 : vector<256xf32> to vector<1x256xf32>
    %19 = arith.mulf %15, %15 : vector<16x256xf32>
    %cst_15 = arith.constant dense<0.000000e+00> : vector<256xf32>
    %20 = vector.multi_reduction <add>, %19, %cst_15 [0] : vector<16x256xf32> to vector<256xf32>
    %21 = vector.shape_cast %20 : vector<256xf32> to vector<1x256xf32>
    %22 = arith.mulf %9, %15 : vector<16x256xf32>
    %cst_16 = arith.constant dense<0.000000e+00> : vector<256xf32>
    %23 = vector.multi_reduction <add>, %22, %cst_16 [0] : vector<16x256xf32> to vector<256xf32>
    %24 = vector.shape_cast %23 : vector<256xf32> to vector<1x256xf32>
    %25 = math.sqrt %18 : vector<1x256xf32>
    %26 = math.sqrt %21 : vector<1x256xf32>
    %cst_17 = arith.constant 9.99999993E-9 : f32
    %27 = vector.broadcast %cst_17 : f32 to vector<1x256xf32>
    %28 = arith.addf %25, %27 : vector<1x256xf32>
    %cst_18 = arith.constant 1.000000e+00 : f32
    %29 = vector.broadcast %cst_18 : f32 to vector<1x256xf32>
    %30 = arith.divf %29, %28 : vector<1x256xf32>
    %cst_19 = arith.constant 9.99999993E-9 : f32
    %31 = vector.broadcast %cst_19 : f32 to vector<1x256xf32>
    %32 = arith.addf %26, %31 : vector<1x256xf32>
    %cst_20 = arith.constant 1.000000e+00 : f32
    %33 = vector.broadcast %cst_20 : f32 to vector<1x256xf32>
    %34 = arith.divf %33, %32 : vector<1x256xf32>
    %35 = arith.mulf %25, %30 : vector<1x256xf32>
    %36 = arith.mulf %26, %34 : vector<1x256xf32>
    %37 = arith.mulf %35, %36 : vector<1x256xf32>
    %38 = arith.mulf %24, %30 : vector<1x256xf32>
    %39 = arith.mulf %38, %34 : vector<1x256xf32>
    %cst_21 = arith.constant 9.99999993E-9 : f32
    %40 = vector.broadcast %cst_21 : f32 to vector<1x256xf32>
    %41 = arith.maximumf %37, %40 : vector<1x256xf32>
    %42 = arith.divf %39, %41 : vector<1x256xf32>
    %43 = vector.broadcast %30 : vector<1x256xf32> to vector<16x256xf32>
    %44 = arith.mulf %9, %43 : vector<16x256xf32>
    %45 = arith.mulf %42, %34 : vector<1x256xf32>
    %46 = vector.broadcast %45 : vector<1x256xf32> to vector<16x256xf32>
    %47 = arith.mulf %46, %15 : vector<16x256xf32>
    %48 = arith.addf %44, %47 : vector<16x256xf32>
    %c0_22 = arith.constant 0 : index
    %c0_23 = arith.constant 0 : index
    %49 = vector.load %arg8[%c0_22, %c0_23] : memref<8x16xf32, #tpu.memory_space<vmem>>, vector<8x16xf32>
    %cst_24 = arith.constant dense<0.000000e+00> : vector<8x256xf32>
    %50 = tpu.matmul %49, %48, %cst_24 {dimension_numbers = #tpu.dot_dimension_numbers<[1], [0], [0], [1], [0, 0, 1, 1], [], []>} : vector<8x16xf32>, vector<16x256xf32>, vector<8x256xf32> -> vector<8x256xf32>
    %c0_25 = arith.constant 0 : index
    %c0_26 = arith.constant 0 : index
    %51 = vector.load %arg9[%c0_25, %c0_26] : memref<8x1xf32, #tpu.memory_space<vmem>>, vector<8x1xf32>
    %52 = vector.broadcast %51 : vector<8x1xf32> to vector<8x256xf32>
    %53 = arith.addf %50, %52 : vector<8x256xf32>
    %cst_27 = arith.constant 0.000000e+00 : f32
    %54 = vector.broadcast %cst_27 : f32 to vector<8x256xf32>
    %55 = arith.maximumf %53, %54 : vector<8x256xf32>
    %c0_28 = arith.constant 0 : index
    %c0_29 = arith.constant 0 : index
    %56 = vector.load %arg10[%c0_28, %c0_29] : memref<32x8xf32, #tpu.memory_space<vmem>>, vector<32x8xf32>
    %cst_30 = arith.constant dense<0.000000e+00> : vector<32x256xf32>
    %57 = tpu.matmul %56, %55, %cst_30 {dimension_numbers = #tpu.dot_dimension_numbers<[1], [0], [0], [1], [0, 0, 1, 1], [], []>} : vector<32x8xf32>, vector<8x256xf32>, vector<32x256xf32> -> vector<32x256xf32>
    %58 = arith.addf %10, %57 : vector<32x256xf32>
    %c0_31 = arith.constant 0 : index
    %c0_32 = arith.constant 0 : index
    %59 = vector.load %arg11[%c0_31, %c0_32] : memref<32x1xf32, #tpu.memory_space<vmem>>, vector<32x1xf32>
    %60 = vector.broadcast %59 : vector<32x1xf32> to vector<32x256xf32>
    %61 = arith.addf %58, %60 : vector<32x256xf32>
    %cst_33 = arith.constant 0.000000e+00 : f32
    %62 = vector.broadcast %cst_33 : f32 to vector<32x256xf32>
    %63 = arith.maximumf %61, %62 : vector<32x256xf32>
    %c0_34 = arith.constant 0 : index
    %c0_35 = arith.constant 0 : index
    %c0_36 = arith.constant 0 : index
    %64 = vector.load %arg12[%c0_34, %c0_35, %c0_36] : memref<1x32x256xf32, #tpu.memory_space<vmem>>, vector<1x32x256xf32>
    %65 = vector.shape_cast %64 : vector<1x32x256xf32> to vector<32x256xf32>
    %66 = vector.shape_cast %63 : vector<32x256xf32> to vector<1x32x256xf32>
    tpu.vector_store %arg12[%c0_34, %c0_35, %c0_36], %66 {strides = array<i32>} : memref<1x32x256xf32, #tpu.memory_space<vmem>>, vector<1x32x256xf32>,
    return
  }
  func.func @transform_0(%arg0: i32, %arg1: i32) -> (i32, i32, i32) {
    %c0_i32 = arith.constant 0 : i32
    %c0_i32_0 = arith.constant 0 : i32
    return %arg0, %c0_i32, %arg1 : i32, i32, i32
  }
  func.func @transform_1(%arg0: i32, %arg1: i32) -> (i32, i32, i32) {
    %c0_i32 = arith.constant 0 : i32
    %c0_i32_0 = arith.constant 0 : i32
    return %arg0, %c0_i32, %arg1 : i32, i32, i32
  }
  func.func @transform_2(%arg0: i32, %arg1: i32) -> (i32, i32) {
    %c0_i32 = arith.constant 0 : i32
    %c0_i32_0 = arith.constant 0 : i32
    %c0_i32_1 = arith.constant 0 : i32
    return %c0_i32, %c0_i32_0 : i32, i32
  }
  func.func @transform_3(%arg0: i32, %arg1: i32) -> (i32, i32) {
    %c0_i32 = arith.constant 0 : i32
    %c0_i32_0 = arith.constant 0 : i32
    %c0_i32_1 = arith.constant 0 : i32
    return %c0_i32, %c0_i32_0 : i32, i32
  }
  func.func @transform_4(%arg0: i32, %arg1: i32) -> (i32, i32) {
    %c0_i32 = arith.constant 0 : i32
    %c0_i32_0 = arith.constant 0 : i32
    %c0_i32_1 = arith.constant 0 : i32
    return %c0_i32, %c0_i32_0 : i32, i32
  }
  func.func @transform_5(%arg0: i32, %arg1: i32) -> (i32, i32) {
    %c0_i32 = arith.constant 0 : i32
    %c0_i32_0 = arith.constant 0 : i32
    %c0_i32_1 = arith.constant 0 : i32
    return %c0_i32, %c0_i32_0 : i32, i32
  }
  func.func @transform_6(%arg0: i32, %arg1: i32) -> (i32, i32) {
    %c0_i32 = arith.constant 0 : i32
    %c0_i32_0 = arith.constant 0 : i32
    %c0_i32_1 = arith.constant 0 : i32
    return %c0_i32, %c0_i32_0 : i32, i32
  }
  func.func @transform_7(%arg0: i32, %arg1: i32) -> (i32, i32) {
    %c0_i32 = arith.constant 0 : i32
    %c0_i32_0 = arith.constant 0 : i32
    %c0_i32_1 = arith.constant 0 : i32
    return %c0_i32, %c0_i32_0 : i32, i32
  }
  func.func @transform_8(%arg0: i32, %arg1: i32) -> (i32, i32) {
    %c0_i32 = arith.constant 0 : i32
    %c0_i32_0 = arith.constant 0 : i32
    %c0_i32_1 = arith.constant 0 : i32
    return %c0_i32, %c0_i32_0 : i32, i32
  }
  func.func @transform_9(%arg0: i32, %arg1: i32) -> (i32, i32) {
    %c0_i32 = arith.constant 0 : i32
    %c0_i32_0 = arith.constant 0 : i32
    %c0_i32_1 = arith.constant 0 : i32
    return %c0_i32, %c0_i32_0 : i32, i32
  }
  func.func @transform_10(%arg0: i32, %arg1: i32) -> (i32, i32, i32) {
    %c0_i32 = arith.constant 0 : i32
    %c0_i32_0 = arith.constant 0 : i32
    return %arg0, %c0_i32, %arg1 : i32, i32, i32
  }
}

</mosaic_0001>

<llo_original>
// kernel: tpu_custom_call.1
$region0: #{tpu_custom_call.1}
  #allocation0 [shape = 'u32[]', space=smem, size = 0x4, offset = 0x4, fixed_abs, tag = 'smem constant byte address 0x4 - core index']
  #allocation1 [shape = 'u32[144,128]{1,0:T(1,128)}', space=vmem, size = 0x12000, scoped, tag = 'internal scratch']
  %s0 = inlined_call_operand.vmem [shape: f32[2,8,256], index: 0, kind: input, shape index: {}]
  %s1 = inlined_call_operand.vmem [shape: f32[2,16,256], index: 1, kind: input, shape index: {}]
  %s2 = inlined_call_operand.vmem [shape: f32[48,8], index: 2, kind: input, shape index: {}]
  %s3 = inlined_call_operand.vmem [shape: f32[16,1], index: 3, kind: input, shape index: {}]
  %s4 = inlined_call_operand.vmem [shape: f32[16,16], index: 4, kind: input, shape index: {}]
  %s5 = inlined_call_operand.vmem [shape: f32[16,1], index: 5, kind: input, shape index: {}]
  %s6 = inlined_call_operand.vmem [shape: f32[8,16], index: 6, kind: input, shape index: {}]
  %s7 = inlined_call_operand.vmem [shape: f32[8,1], index: 7, kind: input, shape index: {}]
  %s8 = inlined_call_operand.vmem [shape: f32[32,8], index: 8, kind: input, shape index: {}]
  %s9 = inlined_call_operand.vmem [shape: f32[32,1], index: 9, kind: input, shape index: {}]
  %s10 = inlined_call_operand.hbm [shape: f32[2,32,256], index: 10, kind: output, shape index: {}]
  %s11 = sld [smem:[#allocation0]]
  $region73: #{tpu_custom_call.1} parent=0
    _
  %s13 = ssub.s32 1, %s11
  %s14 = scalar_select 0, %s13, %s11
  $region1: #{tpu_custom_call.1} parent=0
    #allocation2 [shape = 'u8[65536]{0}', space=vmem, size = 0x10000, scoped, tag = 'output window, operand 0']
    #allocation3 [shape = 's32[2]{0}', space=sflag, size = 0x8, scoped, tag = 'scoped memory for tpu_custom_call.1']
    %15 = vsyncpa [#allocation3], 0
    %s16 = scalar_lea.sflag [#allocation3], 1
    %17 = vsyncpa %s16, 0
    loop: start=0, step=1, limit=4
    $region2: #{tpu_custom_call.1} parent=1 // loop_pre_header
      _
    $region3: #{tpu_custom_call.1} parent=1 // loop_header
      %s19 = sphi 0, %s23
      %p20 = scmp.ge.s32.totalorder %s19, 4
      %s26 = sphi 0, %s38
      %s27 = sphi 0, %s34
      %s28 = sphi 0, %s26
      %s29 = sphi 0, %s27
      %s30 = sphi 0, %s28
      %s31 = sphi 0, %s29
      %s43 = sphi 0, %s45
      %s46 = sphi 0, %s43
      %s47 = sphi 0, %s46
      %s63 = sphi 0, %s47
      %s71 = sphi 0, %s73
      %s74 = sphi 0, %s71
      %s75 = sphi 0, %s74
      %s91 = sphi 0, %s75
      %s95 = sphi 0, %s95
      %s97 = sphi 0, %s95
      %s98 = sphi 0, %s97
      %s112 = sphi 0, %s98
      %s116 = sphi 0, %s116
      %s118 = sphi 0, %s116
      %s119 = sphi 0, %s118
      %s133 = sphi 0, %s119
      %s137 = sphi 0, %s137
      %s139 = sphi 0, %s137
      %s140 = sphi 0, %s139
      %s154 = sphi 0, %s140
      %s158 = sphi 0, %s158
      %s160 = sphi 0, %s158
      %s161 = sphi 0, %s160
      %s175 = sphi 0, %s161
      %s179 = sphi 0, %s179
      %s181 = sphi 0, %s179
      %s182 = sphi 0, %s181
      %s196 = sphi 0, %s182
      %s200 = sphi 0, %s200
      %s202 = sphi 0, %s200
      %s203 = sphi 0, %s202
      %s217 = sphi 0, %s203
      %s221 = sphi 0, %s221
      %s223 = sphi 0, %s221
      %s224 = sphi 0, %s223
      %s238 = sphi 0, %s224
      %s242 = sphi 0, %s242
      %s244 = sphi 0, %s242
      %s245 = sphi 0, %s244
      %s259 = sphi 0, %s245
      %s267 = sphi 0, %s269
      %s270 = sphi 0, %s267
      %s271 = sphi 0, %s270
      %s287 = sphi 0, %s271
    $region4: #{tpu_custom_call.1} parent=1 // loop_header_branch
      %22 = sbr.rel (%p20) target = $region8
    $region5: #{tpu_custom_call.1} parent=1 // loop_body
      %s24 = ssub.s32 %s19, 1
      %s25 = ssub.s32 %s19, 2
      %s32 = sadd.s32 1, %s27
      %p33 = scmp.ge.s32.totalorder %s32, 1
      %s34 = scalar_select %p33, 0, %s32
      %s35 = sadd.s32 1, %s26
      %s36 = scalar_select %p33, %s35, %s26
      %p37 = scmp.ge.s32.totalorder %s36, 2
      %s38 = scalar_select %p37, 0, %s36
      %s39 = ssub.s32 %s26, %s38
      %s40 = ssub.s32 %s27, %s34
      %s41 = sor.u32 %s39, %s40
      %p42 = scmp.eq.s32.totalorder %s41, 0
      %s44 = sadd.s32 %s43, 1
      %s45 = scalar_select %p42, %s43, %s44
      %p48 = pneg %p42
      %p49 = scmp.eq.s32.totalorder %s19, 1
      %p50 = por %p48, %p49
      %p51 = scmp.ne.s32.totalorder %s43, %s46
      %p52 = scmp.eq.s32.totalorder %s19, 0
      %p53 = por %p51, %p52
      %p54 = scmp.ne.s32.totalorder %s43, %s46
      %p55 = scmp.eq.s32.totalorder %s24, 1
      %p56 = por %p54, %p55
      %p57 = scmp.ne.s32.totalorder %s46, %s47
      %p58 = scmp.eq.s32.totalorder %s24, 0
      %p59 = por %p57, %p58
      %p60 = scmp.ne.s32.totalorder %s46, %s47
      %p61 = scmp.eq.s32.totalorder %s25, 1
      %p62 = por %p60, %p61
      %p64 = scmp.ne.s32.totalorder %s47, %s63
      %p65 = scmp.eq.s32.totalorder %s25, 0
      %p66 = por %p64, %p65
      %s67 = ssub.s32 %s26, %s38
      %s68 = ssub.s32 %s27, %s34
      %s69 = sor.u32 %s67, %s68
      %p70 = scmp.eq.s32.totalorder %s69, 0
      %s72 = sadd.s32 %s71, 1
      %s73 = scalar_select %p70, %s71, %s72
      %p76 = pneg %p70
      %p77 = scmp.eq.s32.totalorder %s19, 1
      %p78 = por %p76, %p77
      %p79 = scmp.ne.s32.totalorder %s71, %s74
      %p80 = scmp.eq.s32.totalorder %s19, 0
      %p81 = por %p79, %p80
      %p82 = scmp.ne.s32.totalorder %s71, %s74
      %p83 = scmp.eq.s32.totalorder %s24, 1
      %p84 = por %p82, %p83
      %p85 = scmp.ne.s32.totalorder %s74, %s75
      %p86 = scmp.eq.s32.totalorder %s24, 0
      %p87 = por %p85, %p86
      %p88 = scmp.ne.s32.totalorder %s74, %s75
      %p89 = scmp.eq.s32.totalorder %s25, 1
      %p90 = por %p88, %p89
      %p92 = scmp.ne.s32.totalorder %s75, %s91
      %p93 = scmp.eq.s32.totalorder %s25, 0
      %p94 = por %p92, %p93
      %s96 = sadd.s32 %s95, 1
      %p99 = scmp.eq.s32.totalorder %s19, 1
      %p100 = scmp.ne.s32.totalorder %s95, %s97
      %p101 = scmp.eq.s32.totalorder %s19, 0
      %p102 = por %p100, %p101
      %p103 = scmp.ne.s32.totalorder %s95, %s97
      %p104 = scmp.eq.s32.totalorder %s24, 1
      %p105 = por %p103, %p104
      %p106 = scmp.ne.s32.totalorder %s97, %s98
      %p107 = scmp.eq.s32.totalorder %s24, 0
      %p108 = por %p106, %p107
      %p109 = scmp.ne.s32.totalorder %s97, %s98
      %p110 = scmp.eq.s32.totalorder %s25, 1
      %p111 = por %p109, %p110
      %p113 = scmp.ne.s32.totalorder %s98, %s112
      %p114 = scmp.eq.s32.totalorder %s25, 0
      %p115 = por %p113, %p114
      %s117 = sadd.s32 %s116, 1
      %p120 = scmp.eq.s32.totalorder %s19, 1
      %p121 = scmp.ne.s32.totalorder %s116, %s118
      %p122 = scmp.eq.s32.totalorder %s19, 0
      %p123 = por %p121, %p122
      %p124 = scmp.ne.s32.totalorder %s116, %s118
      %p125 = scmp.eq.s32.totalorder %s24, 1
      %p126 = por %p124, %p125
      %p127 = scmp.ne.s32.totalorder %s118, %s119
      %p128 = scmp.eq.s32.totalorder %s24, 0
      %p129 = por %p127, %p128
      %p130 = scmp.ne.s32.totalorder %s118, %s119
      %p131 = scmp.eq.s32.totalorder %s25, 1
      %p132 = por %p130, %p131
      %p134 = scmp.ne.s32.totalorder %s119, %s133
      %p135 = scmp.eq.s32.totalorder %s25, 0
      %p136 = por %p134, %p135
      %s138 = sadd.s32 %s137, 1
      %p141 = scmp.eq.s32.totalorder %s19, 1
      %p142 = scmp.ne.s32.totalorder %s137, %s139
      %p143 = scmp.eq.s32.totalorder %s19, 0
      %p144 = por %p142, %p143
      %p145 = scmp.ne.s32.totalorder %s137, %s139
      %p146 = scmp.eq.s32.totalorder %s24, 1
      %p147 = por %p145, %p146
      %p148 = scmp.ne.s32.totalorder %s139, %s140
      %p149 = scmp.eq.s32.totalorder %s24, 0
      %p150 = por %p148, %p149
      %p151 = scmp.ne.s32.totalorder %s139, %s140
      %p152 = scmp.eq.s32.totalorder %s25, 1
      %p153 = por %p151, %p152
      %p155 = scmp.ne.s32.totalorder %s140, %s154
      %p156 = scmp.eq.s32.totalorder %s25, 0
      %p157 = por %p155, %p156
      %s159 = sadd.s32 %s158, 1
      %p162 = scmp.eq.s32.totalorder %s19, 1
      %p163 = scmp.ne.s32.totalorder %s158, %s160
      %p164 = scmp.eq.s32.totalorder %s19, 0
      %p165 = por %p163, %p164
      %p166 = scmp.ne.s32.totalorder %s158, %s160
      %p167 = scmp.eq.s32.totalorder %s24, 1
      %p168 = por %p166, %p167
      %p169 = scmp.ne.s32.totalorder %s160, %s161
      %p170 = scmp.eq.s32.totalorder %s24, 0
      %p171 = por %p169, %p170
      %p172 = scmp.ne.s32.totalorder %s160, %s161
      %p173 = scmp.eq.s32.totalorder %s25, 1
      %p174 = por %p172, %p173
      %p176 = scmp.ne.s32.totalorder %s161, %s175
      %p177 = scmp.eq.s32.totalorder %s25, 0
      %p178 = por %p176, %p177
      %s180 = sadd.s32 %s179, 1
      %p183 = scmp.eq.s32.totalorder %s19, 1
      %p184 = scmp.ne.s32.totalorder %s179, %s181
      %p185 = scmp.eq.s32.totalorder %s19, 0
      %p186 = por %p184, %p185
      %p187 = scmp.ne.s32.totalorder %s179, %s181
      %p188 = scmp.eq.s32.totalorder %s24, 1
      %p189 = por %p187, %p188
      %p190 = scmp.ne.s32.totalorder %s181, %s182
      %p191 = scmp.eq.s32.totalorder %s24, 0
      %p192 = por %p190, %p191
      %p193 = scmp.ne.s32.totalorder %s181, %s182
      %p194 = scmp.eq.s32.totalorder %s25, 1
      %p195 = por %p193, %p194
      %p197 = scmp.ne.s32.totalorder %s182, %s196
      %p198 = scmp.eq.s32.totalorder %s25, 0
      %p199 = por %p197, %p198
      %s201 = sadd.s32 %s200, 1
      %p204 = scmp.eq.s32.totalorder %s19, 1
      %p205 = scmp.ne.s32.totalorder %s200, %s202
      %p206 = scmp.eq.s32.totalorder %s19, 0
      %p207 = por %p205, %p206
      %p208 = scmp.ne.s32.totalorder %s200, %s202
      %p209 = scmp.eq.s32.totalorder %s24, 1
      %p210 = por %p208, %p209
      %p211 = scmp.ne.s32.totalorder %s202, %s203
      %p212 = scmp.eq.s32.totalorder %s24, 0
      %p213 = por %p211, %p212
      %p214 = scmp.ne.s32.totalorder %s202, %s203
      %p215 = scmp.eq.s32.totalorder %s25, 1
      %p216 = por %p214, %p215
      %p218 = scmp.ne.s32.totalorder %s203, %s217
      %p219 = scmp.eq.s32.totalorder %s25, 0
      %p220 = por %p218, %p219
      %s222 = sadd.s32 %s221, 1
      %p225 = scmp.eq.s32.totalorder %s19, 1
      %p226 = scmp.ne.s32.totalorder %s221, %s223
      %p227 = scmp.eq.s32.totalorder %s19, 0
      %p228 = por %p226, %p227
      %p229 = scmp.ne.s32.totalorder %s221, %s223
      %p230 = scmp.eq.s32.totalorder %s24, 1
      %p231 = por %p229, %p230
      %p232 = scmp.ne.s32.totalorder %s223, %s224
      %p233 = scmp.eq.s32.totalorder %s24, 0
      %p234 = por %p232, %p233
      %p235 = scmp.ne.s32.totalorder %s223, %s224
      %p236 = scmp.eq.s32.totalorder %s25, 1
      %p237 = por %p235, %p236
      %p239 = scmp.ne.s32.totalorder %s224, %s238
      %p240 = scmp.eq.s32.totalorder %s25, 0
      %p241 = por %p239, %p240
      %s243 = sadd.s32 %s242, 1
      %p246 = scmp.eq.s32.totalorder %s19, 1
      %p247 = scmp.ne.s32.totalorder %s242, %s244
      %p248 = scmp.eq.s32.totalorder %s19, 0
      %p249 = por %p247, %p248
      %p250 = scmp.ne.s32.totalorder %s242, %s244
      %p251 = scmp.eq.s32.totalorder %s24, 1
      %p252 = por %p250, %p251
      %p253 = scmp.ne.s32.totalorder %s244, %s245
      %p254 = scmp.eq.s32.totalorder %s24, 0
      %p255 = por %p253, %p254
      %p256 = scmp.ne.s32.totalorder %s244, %s245
      %p257 = scmp.eq.s32.totalorder %s25, 1
      %p258 = por %p256, %p257
      %p260 = scmp.ne.s32.totalorder %s245, %s259
      %p261 = scmp.eq.s32.totalorder %s25, 0
      %p262 = por %p260, %p261
      %s263 = ssub.s32 %s26, %s38
      %s264 = ssub.s32 %s27, %s34
      %s265 = sor.u32 %s263, %s264
      %p266 = scmp.eq.s32.totalorder %s265, 0
      %s268 = sadd.s32 %s267, 1
      %s269 = scalar_select %p266, %s267, %s268
      %p272 = pneg %p266
      %p273 = scmp.eq.s32.totalorder %s19, 1
      %p274 = por %p272, %p273
      %p275 = scmp.ne.s32.totalorder %s267, %s270
      %p276 = scmp.eq.s32.totalorder %s19, 0
      %p277 = por %p275, %p276
      %p278 = scmp.ne.s32.totalorder %s267, %s270
      %p279 = scmp.eq.s32.totalorder %s24, 1
      %p280 = por %p278, %p279
      %p281 = scmp.ne.s32.totalorder %s270, %s271
      %p282 = scmp.eq.s32.totalorder %s24, 0
      %p283 = por %p281, %p282
      %p284 = scmp.ne.s32.totalorder %s270, %s271
      %p285 = scmp.eq.s32.totalorder %s25, 1
      %p286 = por %p284, %p285
      %p288 = scmp.ne.s32.totalorder %s271, %s287
      %p289 = scmp.eq.s32.totalorder %s25, 0
      %p290 = por %p288, %p289
      %p291 = scmp.le.s32.totalorder 1, %s19
      %p292 = scmp.lt.s32.totalorder %s19, 3
      %p293 = pnand %p291, %p292
      %p294 = pneg %p293
      // Predicated region
      $region9: #{tpu_custom_call.1} parent=5 // pred_check
        _
      $region10: #{tpu_custom_call.1} parent=5 // pred_check_branch
        %296 = sbr.rel (%p293) target = $region12
      $region11: #{tpu_custom_call.1} parent=5 // pred_region
        %s297 = ssub.s32 %s19, 1
        // Predicated region
        $region13: #{tpu_custom_call.1} parent=11 // pred_check
          %p298 = pneg %p108
        $region14: #{tpu_custom_call.1} parent=11 // pred_check_branch
          %300 = sbr.rel (%p298) target = $region16
        $region15: #{tpu_custom_call.1} parent=11 // pred_region
          _
        $region16: #{tpu_custom_call.1} parent=11 // pred_fallthru
          _
        // Predicated region
        $region17: #{tpu_custom_call.1} parent=11 // pred_check
          %p301 = pneg %p129
        $region18: #{tpu_custom_call.1} parent=11 // pred_check_branch
          %303 = sbr.rel (%p301) target = $region20
        $region19: #{tpu_custom_call.1} parent=11 // pred_region
          _
        $region20: #{tpu_custom_call.1} parent=11 // pred_fallthru
          _
        // Predicated region
        $region21: #{tpu_custom_call.1} parent=11 // pred_check
          %p304 = pneg %p150
        $region22: #{tpu_custom_call.1} parent=11 // pred_check_branch
          %306 = sbr.rel (%p304) target = $region24
        $region23: #{tpu_custom_call.1} parent=11 // pred_region
          _
        $region24: #{tpu_custom_call.1} parent=11 // pred_fallthru
          _
        // Predicated region
        $region25: #{tpu_custom_call.1} parent=11 // pred_check
          %p307 = pneg %p171
        $region26: #{tpu_custom_call.1} parent=11 // pred_check_branch
          %309 = sbr.rel (%p307) target = $region28
        $region27: #{tpu_custom_call.1} parent=11 // pred_region
          _
        $region28: #{tpu_custom_call.1} parent=11 // pred_fallthru
          _
        // Predicated region
        $region29: #{tpu_custom_call.1} parent=11 // pred_check
          %p310 = pneg %p192
        $region30: #{tpu_custom_call.1} parent=11 // pred_check_branch
          %312 = sbr.rel (%p310) target = $region32
        $region31: #{tpu_custom_call.1} parent=11 // pred_region
          _
        $region32: #{tpu_custom_call.1} parent=11 // pred_fallthru
          _
        // Predicated region
        $region33: #{tpu_custom_call.1} parent=11 // pred_check
          %p313 = pneg %p213
        $region34: #{tpu_custom_call.1} parent=11 // pred_check_branch
          %315 = sbr.rel (%p313) target = $region36
        $region35: #{tpu_custom_call.1} parent=11 // pred_region
          _
        $region36: #{tpu_custom_call.1} parent=11 // pred_fallthru
          _
        // Predicated region
        $region37: #{tpu_custom_call.1} parent=11 // pred_check
          %p316 = pneg %p234
        $region38: #{tpu_custom_call.1} parent=11 // pred_check_branch
          %318 = sbr.rel (%p316) target = $region40
        $region39: #{tpu_custom_call.1} parent=11 // pred_region
          _
        $region40: #{tpu_custom_call.1} parent=11 // pred_fallthru
          _
        // Predicated region
        $region41: #{tpu_custom_call.1} parent=11 // pred_check
          %p319 = pneg %p255
        $region42: #{tpu_custom_call.1} parent=11 // pred_check_branch
          %321 = sbr.rel (%p319) target = $region44
        $region43: #{tpu_custom_call.1} parent=11 // pred_region
          _
        $region44: #{tpu_custom_call.1} parent=11 // pred_fallthru
          _
      $region12: #{tpu_custom_call.1} parent=5 // pred_fallthru
        _
      %p322 = scmp.lt.s32.totalorder %s19, 2
      // Predicated region
      $region45: #{tpu_custom_call.1} parent=5 // pred_check
        %p323 = pneg %p322
      $region46: #{tpu_custom_call.1} parent=5 // pred_check_branch
        %325 = sbr.rel (%p323) target = $region48
      $region47: #{tpu_custom_call.1} parent=5 // pred_region
        // Predicated region
        $region49: #{tpu_custom_call.1} parent=47 // pred_check
          %p326 = pneg %p53
        $region50: #{tpu_custom_call.1} parent=47 // pred_check_branch
          %328 = sbr.rel (%p326) target = $region52
        $region51: #{tpu_custom_call.1} parent=47 // pred_region
          %s329 = smul.u32 2, %s27
          %p330 = scmp.lt.s32.totalorder %s26, 1
          %s331 = scalar_select %p330, %s26, 1
          %p332 = scmp.lt.s32.totalorder %s329, 1
          %s333 = scalar_select %p332, %s329, 1
          %s334 = smul.addr %s331, 2
          %s335 = sadd.s32 %s333, %s334
          %s336 = smul.addr %s335, 8
          %s337 = scalar_lea.vmem %s0, %s336
          %s338 = smul.u32 2, %s27
        $region52: #{tpu_custom_call.1} parent=47 // pred_fallthru
          _
        // Predicated region
        $region53: #{tpu_custom_call.1} parent=47 // pred_check
          %p339 = pneg %p81
        $region54: #{tpu_custom_call.1} parent=47 // pred_check_branch
          %341 = sbr.rel (%p339) target = $region56
        $region55: #{tpu_custom_call.1} parent=47 // pred_region
          %s342 = smul.u32 2, %s27
          %p343 = scmp.lt.s32.totalorder %s26, 1
          %s344 = scalar_select %p343, %s26, 1
          %p345 = scmp.lt.s32.totalorder %s342, 1
          %s346 = scalar_select %p345, %s342, 1
          %s347 = smul.addr %s344, 4
          %s348 = sadd.s32 %s346, %s347
          %s349 = smul.addr %s348, 8
          %s350 = scalar_lea.vmem %s1, %s349
          %s351 = smul.u32 2, %s27
        $region56: #{tpu_custom_call.1} parent=47 // pred_fallthru
          _
      $region48: #{tpu_custom_call.1} parent=5 // pred_fallthru
        _
      %p352 = scmp.le.s32.totalorder 1, %s19
      %p353 = scmp.lt.s32.totalorder %s19, 3
      %p354 = pnand %p352, %p353
      %p355 = pneg %p354
      // Predicated region
      $region57: #{tpu_custom_call.1} parent=5 // pred_check
        _
      $region58: #{tpu_custom_call.1} parent=5 // pred_check_branch
        %357 = sbr.rel (%p354) target = $region60
      $region59: #{tpu_custom_call.1} parent=5 // pred_region
        %s358 = ssub.s32 %s19, 1
        %s359 = smul.u32 2, %s29
        %p360 = scmp.lt.s32.totalorder %s28, 1
        %s361 = scalar_select %p360, %s28, 1
        %p362 = scmp.lt.s32.totalorder %s359, 1
        %s363 = scalar_select %p362, %s359, 1
        %s364 = smul.addr %s361, 2
        %s365 = sadd.s32 %s363, %s364
        %s366 = smul.addr %s365, 8
        %s367 = scalar_lea.vmem %s0, %s366
        %p368 = pneg %p59
        %p369 = pneg %p56
        %s370 = smul.u32 2, %s29
        %p371 = scmp.lt.s32.totalorder %s28, 1
        %s372 = scalar_select %p371, %s28, 1
        %p373 = scmp.lt.s32.totalorder %s370, 1
        %s374 = scalar_select %p373, %s370, 1
        %s375 = smul.addr %s372, 4
        %s376 = sadd.s32 %s374, %s375
        %s377 = smul.addr %s376, 8
        %s378 = scalar_lea.vmem %s1, %s377
        %p379 = pneg %p87
        %p380 = pneg %p84
        %p381 = pneg %p108
        %p382 = pneg %p105
        %p383 = pneg %p129
        %p384 = pneg %p126
        %p385 = pneg %p150
        %p386 = pneg %p147
        %p387 = pneg %p171
        %p388 = pneg %p168
        %p389 = pneg %p192
        %p390 = pneg %p189
        %p391 = pneg %p213
        %p392 = pneg %p210
        %p393 = pneg %p234
        %p394 = pneg %p231
        %p395 = pneg %p255
        %p396 = pneg %p252
        %p397 = pneg %p283
        %p398 = pneg %p280
        %s399 = sand.u32 %s270, 1
        %s400 = scalar_lea.sflag [#allocation3], %s399
        %s401 = sand.u32 %s270, 1
        %s402 = smul.addr %s401, 64
        %s403 = scalar_lea.vmem [#allocation2], %s402
        %s404 = smul.u32 2, %s29
        %p405 = scmp.lt.s32.totalorder %s28, 1
        %s406 = scalar_select %p405, %s28, 1
        %p407 = scmp.lt.s32.totalorder %s404, 1
        %s408 = scalar_select %p407, %s404, 1
        %s409 = smul.addr %s406, 2
        %s410 = sadd.s32 %s408, %s409
        %s411 = smul.addr %s410, 8
        %s412 = scalar_lea.vmem %s0, %s411
        %s413 = smul.u32 2, %s29
        %s414 = smul.u32 2, %s29
        %p415 = scmp.lt.s32.totalorder %s28, 1
        %s416 = scalar_select %p415, %s28, 1
        %p417 = scmp.lt.s32.totalorder %s414, 1
        %s418 = scalar_select %p417, %s414, 1
        %s419 = smul.addr %s416, 4
        %s420 = sadd.s32 %s418, %s419
        %s421 = smul.addr %s420, 8
        %s422 = scalar_lea.vmem %s1, %s421
        %s423 = smul.u32 2, %s29
        %s424 = smul.u32 2, %s29
        %v425 = vld [vmem:[%s412] sm:$0xff]
        %v426 = vld [vmem:[%s412 + $0x8] sm:$0xff]
        %v427 = vld [vmem:[%s422] sm:$0xff]
        %v428 = vld [vmem:[%s422 + $0x8] sm:$0xff]
        %v429 = vld [vmem:[%s422 + $0x10] sm:$0xff]
        %v430 = vld [vmem:[%s422 + $0x18] sm:$0xff]
        %v431 = vld [vmem:[%s2] sm:$0xff]
        %v432 = vld [vmem:[%s2 + $0x8] sm:$0xff]
        %v433 = vld [vmem:[%s2 + $0x10] sm:$0xff]
        %v434 = vld [vmem:[%s2 + $0x18] sm:$0xff]
        %v435 = vld [vmem:[%s2 + $0x20] sm:$0xff]
        %v436 = vld [vmem:[%s2 + $0x28] sm:$0xff]
        %vm437 = vcmask 64512
        %v439 = vsel %vm437, %v431, 0
        %v442 = vsel %vm437, %v432, 0
        %v445 = vsel %vm437, %v433, 0
        %v448 = vsel %vm437, %v434, 0
        %v451 = vsel %vm437, %v435, 0
        %v454 = vsel %vm437, %v436, 0
        %456 = vmatprep.subr.mxu0 0.0
        %457 = vmatpush1.msra.mxu0 0.0
        %458 = vmatprep.subr.mxu0 0.0
        %459 = vmatpush1.msra.mxu0 0.0
        %460 = vmatprep.subr.mxu0 0.0
        %461 = vmatpush1.msra.mxu0 0.0
        %462 = vmatprep.subr.mxu0 0.0
        %463 = vmatpush1.msra.mxu0 0.0
        %464 = vmatprep.subr.mxu0 0.0
        %465 = vmatpush1.msra.mxu0 0.0
        %466 = vmatprep.subr.mxu0 0.0
        %467 = vmatpush1.msra.mxu0 0.0
        %468 = vmatprep.subr.mxu0 0.0
        %469 = vmatpush1.msra.mxu0 0.0
        %470 = vmatprep.subr.mxu0 0.0
        %471 = vmatpush1.msra.mxu0 0.0
        %472 = vmatprep.subr.mxu0 0.0
        %473 = vmatpush1.msra.mxu0 0.0
        %474 = vmatprep.subr.mxu0 0.0
        %475 = vmatpush1.msra.mxu0 0.0
        %476 = vmatprep.subr.mxu0 0.0
        %477 = vmatpush1.msra.mxu0 0.0
        %478 = vmatprep.subr.mxu0 0.0
        %479 = vmatpush1.msra.mxu0 0.0
        %480 = vmatprep.subr.mxu0 0.0
        %481 = vmatpush1.msra.mxu0 0.0
        %482 = vmatprep.subr.mxu0 0.0
        %483 = vmatpush1.msra.mxu0 0.0
        %484 = vmatprep.subr.mxu0 0.0
        %485 = vmatpush1.msra.mxu0 0.0
        %486 = vmatprep.subr.mxu0 %v426
        %487 = vmatpush1.msra.mxu0 %v425
        %488 = vmatprep.subr.mxu0 0.0
        %489 = vmatpush2.msra.mxu0 0.0
        %490 = vmatprep.subr.mxu0 0.0
        %491 = vmatpush2.msra.mxu0 0.0
        %492 = vmatprep.subr.mxu0 0.0
        %493 = vmatpush2.msra.mxu0 0.0
        %494 = vmatprep.subr.mxu0 0.0
        %495 = vmatpush2.msra.mxu0 0.0
        %496 = vmatprep.subr.mxu0 0.0
        %497 = vmatpush2.msra.mxu0 0.0
        %498 = vmatprep.subr.mxu0 0.0
        %499 = vmatpush2.msra.mxu0 0.0
        %500 = vmatprep.subr.mxu0 0.0
        %501 = vmatpush2.msra.mxu0 0.0
        %502 = vmatprep.subr.mxu0 0.0
        %503 = vmatpush2.msra.mxu0 0.0
        %504 = vmatprep.subr.mxu0 0.0
        %505 = vmatpush2.msra.mxu0 0.0
        %506 = vmatprep.subr.mxu0 0.0
        %507 = vmatpush2.msra.mxu0 0.0
        %508 = vmatprep.subr.mxu0 0.0
        %509 = vmatpush2.msra.mxu0 0.0
        %510 = vmatprep.subr.mxu0 0.0
        %511 = vmatpush2.msra.mxu0 0.0
        %512 = vmatprep.subr.mxu0 0.0
        %513 = vmatpush2.msra.mxu0 0.0
        %514 = vmatprep.subr.mxu0 0.0
        %515 = vmatpush2.msra.mxu0 0.0
        %516 = vmatprep.subr.mxu0 0.0
        %517 = vmatpush2.msra.mxu0 0.0
        %518 = vmatprep.subr.mxu0 0.0
        %519 = vmatpush2.msra.mxu0 0.0
        %520 = vmatprep.mubr.f32.mxu0 0.0
        %521 = vmatmul.mubr.f32.gmra.mxu0 %v439
        %v522 = vpop.f32.mrf.mxu0
        %v523 = vadd.f32 0.0, %v522
        %v524 = vpop.f32.mrf.mxu0
        %v525 = vadd.f32 0.0, %v524
        %526 = vmatprep.mubr.f32.mxu0 0.0
        %527 = vmatmul.mubr.f32.gmra.mxu0 %v442
        %v528 = vpop.f32.mrf.mxu0
        %v529 = vadd.f32 0.0, %v528
        %v530 = vpop.f32.mrf.mxu0
        %v531 = vadd.f32 0.0, %v530
        %532 = vmatprep.mubr.f32.mxu0 0.0
        %533 = vmatmul.mubr.f32.gmra.mxu0 %v445
        %v534 = vpop.f32.mrf.mxu0
        %v535 = vadd.f32 0.0, %v534
        %v536 = vpop.f32.mrf.mxu0
        %v537 = vadd.f32 0.0, %v536
        %538 = vmatprep.mubr.f32.mxu0 0.0
        %539 = vmatmul.mubr.f32.gmra.mxu0 %v448
        %v540 = vpop.f32.mrf.mxu0
        %v541 = vadd.f32 0.0, %v540
        %v542 = vpop.f32.mrf.mxu0
        %v543 = vadd.f32 0.0, %v542
        %544 = vmatprep.mubr.f32.mxu0 0.0
        %545 = vmatmul.mubr.f32.gmra.mxu0 %v451
        %v546 = vpop.f32.mrf.mxu0
        %v547 = vadd.f32 0.0, %v546
        %v548 = vpop.f32.mrf.mxu0
        %v549 = vadd.f32 0.0, %v548
        %550 = vmatprep.mubr.f32.mxu0 0.0
        %551 = vmatmul.mubr.f32.gmra.mxu0 %v454
        %v552 = vpop.f32.mrf.mxu0
        %v553 = vadd.f32 0.0, %v552
        %v554 = vpop.f32.mrf.mxu0
        %v555 = vadd.f32 0.0, %v554
        %556 = vdwg.mxu0
        %v557 = vld [vmem:[%s3] sm:$0xff]
        %v558 = vld [vmem:[%s3 + $0x8] sm:$0xff]
        %560 = vset.pattern.permute.xlu0 0
        %561 = vperm.xlu0 %560, %v557
        %v562 = vpop.permute.xlu0 %561
        %565 = vset.pattern.permute.xlu0 0
        %566 = vperm.xlu0 %565, %v558
        %v567 = vpop.permute.xlu0 %566
        %v569 = vadd.f32 %v523, %v562
        %v570 = vadd.f32 %v525, %v562
        %v571 = vadd.f32 %v529, %v567
        %v572 = vadd.f32 %v531, %v567
        %v573 = vld [vmem:[%s4] sm:$0xff]
        %v574 = vld [vmem:[%s4 + $0x8] sm:$0xff]
        %v575 = vld [vmem:[%s5] sm:$0xff]
        %v576 = vld [vmem:[%s5 + $0x8] sm:$0xff]
        %578 = vset.pattern.permute.xlu0 0
        %579 = vperm.xlu0 %578, %v575
        %v580 = vpop.permute.xlu0 %579
        %583 = vset.pattern.permute.xlu0 0
        %584 = vperm.xlu0 %583, %v576
        %v585 = vpop.permute.xlu0 %584
        %vm587 = vcmask 130048
        %v589 = vsel %vm587, %v573, 0
        %v592 = vsel %vm587, %v574, 0
        %594 = vmatprep.subr.mxu0 0.0
        %595 = vmatpush1.msra.mxu0 0.0
        %596 = vmatprep.subr.mxu0 0.0
        %597 = vmatpush1.msra.mxu0 0.0
        %598 = vmatprep.subr.mxu0 0.0
        %599 = vmatpush1.msra.mxu0 0.0
        %600 = vmatprep.subr.mxu0 0.0
        %601 = vmatpush1.msra.mxu0 0.0
        %602 = vmatprep.subr.mxu0 0.0
        %603 = vmatpush1.msra.mxu0 0.0
        %604 = vmatprep.subr.mxu0 0.0
        %605 = vmatpush1.msra.mxu0 0.0
        %606 = vmatprep.subr.mxu0 0.0
        %607 = vmatpush1.msra.mxu0 0.0
        %608 = vmatprep.subr.mxu0 0.0
        %609 = vmatpush1.msra.mxu0 0.0
        %610 = vmatprep.subr.mxu0 0.0
        %611 = vmatpush1.msra.mxu0 0.0
        %612 = vmatprep.subr.mxu0 0.0
        %613 = vmatpush1.msra.mxu0 0.0
        %614 = vmatprep.subr.mxu0 0.0
        %615 = vmatpush1.msra.mxu0 0.0
        %616 = vmatprep.subr.mxu0 0.0
        %617 = vmatpush1.msra.mxu0 0.0
        %618 = vmatprep.subr.mxu0 0.0
        %619 = vmatpush1.msra.mxu0 0.0
        %620 = vmatprep.subr.mxu0 0.0
        %621 = vmatpush1.msra.mxu0 0.0
        %622 = vmatprep.subr.mxu0 %v430
        %623 = vmatpush1.msra.mxu0 %v429
        %624 = vmatprep.subr.mxu0 %v428
        %625 = vmatpush1.msra.mxu0 %v427
        %626 = vmatprep.subr.mxu0 0.0
        %627 = vmatpush2.msra.mxu0 0.0
        %628 = vmatprep.subr.mxu0 0.0
        %629 = vmatpush2.msra.mxu0 0.0
        %630 = vmatprep.subr.mxu0 0.0
        %631 = vmatpush2.msra.mxu0 0.0
        %632 = vmatprep.subr.mxu0 0.0
        %633 = vmatpush2.msra.mxu0 0.0
        %634 = vmatprep.subr.mxu0 0.0
        %635 = vmatpush2.msra.mxu0 0.0
        %636 = vmatprep.subr.mxu0 0.0
        %637 = vmatpush2.msra.mxu0 0.0
        %638 = vmatprep.subr.mxu0 0.0
        %639 = vmatpush2.msra.mxu0 0.0
        %640 = vmatprep.subr.mxu0 0.0
        %641 = vmatpush2.msra.mxu0 0.0
        %642 = vmatprep.subr.mxu0 0.0
        %643 = vmatpush2.msra.mxu0 0.0
        %644 = vmatprep.subr.mxu0 0.0
        %645 = vmatpush2.msra.mxu0 0.0
        %646 = vmatprep.subr.mxu0 0.0
        %647 = vmatpush2.msra.mxu0 0.0
        %648 = vmatprep.subr.mxu0 0.0
        %649 = vmatpush2.msra.mxu0 0.0
        %650 = vmatprep.subr.mxu0 0.0
        %651 = vmatpush2.msra.mxu0 0.0
        %652 = vmatprep.subr.mxu0 0.0
        %653 = vmatpush2.msra.mxu0 0.0
        %654 = vmatprep.subr.mxu0 0.0
        %655 = vmatpush2.msra.mxu0 0.0
        %656 = vmatprep.subr.mxu0 0.0
        %657 = vmatpush2.msra.mxu0 0.0
        %658 = vmatprep.mubr.f32.mxu0 0.0
        %659 = vmatmul.mubr.f32.gmra.mxu0 %v589
        %v660 = vpop.f32.mrf.mxu0
        %v661 = vadd.f32 %v580, %v660
        %v662 = vpop.f32.mrf.mxu0
        %v663 = vadd.f32 %v580, %v662
        %664 = vmatprep.mubr.f32.mxu0 0.0
        %665 = vmatmul.mubr.f32.gmra.mxu0 %v592
        %v666 = vpop.f32.mrf.mxu0
        %v667 = vadd.f32 %v585, %v666
        %v668 = vpop.f32.mrf.mxu0
        %v669 = vadd.f32 %v585, %v668
        %670 = vdwg.mxu0
        %v671 = vmul.f32 %v569, %v569
        %v672 = vmul.f32 %v570, %v570
        %v673 = vmul.f32 %v571, %v571
        %v674 = vmul.f32 %v572, %v572
        %v675 = vadd.f32 %v671, %v673
        %v676 = vrot.slane %v675, 4
        %v677 = vadd.f32 %v675, %v676
        %v678 = vrot.slane %v677, 2
        %v679 = vadd.f32 %v677, %v678
        %v680 = vrot.slane %v679, 1
        %v681 = vadd.f32 %v679, %v680
        %v682 = vadd.f32 %v672, %v674
        %v683 = vrot.slane %v682, 4
        %v684 = vadd.f32 %v682, %v683
        %v685 = vrot.slane %v684, 2
        %v686 = vadd.f32 %v684, %v685
        %v687 = vrot.slane %v686, 1
        %v688 = vadd.f32 %v686, %v687
        %v689 = vmul.f32 %v661, %v661
        %v690 = vmul.f32 %v663, %v663
        %v691 = vmul.f32 %v667, %v667
        %v692 = vmul.f32 %v669, %v669
        %v693 = vadd.f32 %v689, %v691
        %v694 = vrot.slane %v693, 4
        %v695 = vadd.f32 %v693, %v694
        %v696 = vrot.slane %v695, 2
        %v697 = vadd.f32 %v695, %v696
        %v698 = vrot.slane %v697, 1
        %v699 = vadd.f32 %v697, %v698
        %v700 = vadd.f32 %v690, %v692
        %v701 = vrot.slane %v700, 4
        %v702 = vadd.f32 %v700, %v701
        %v703 = vrot.slane %v702, 2
        %v704 = vadd.f32 %v702, %v703
        %v705 = vrot.slane %v704, 1
        %v706 = vadd.f32 %v704, %v705
        %v707 = vmul.f32 %v569, %v661
        %v708 = vmul.f32 %v570, %v663
        %v709 = vmul.f32 %v571, %v667
        %v710 = vmul.f32 %v572, %v669
        %v711 = vadd.f32 %v707, %v709
        %v712 = vrot.slane %v711, 4
        %v713 = vadd.f32 %v711, %v712
        %v714 = vrot.slane %v713, 2
        %v715 = vadd.f32 %v713, %v714
        %v716 = vrot.slane %v715, 1
        %v717 = vadd.f32 %v715, %v716
        %v718 = vadd.f32 %v708, %v710
        %v719 = vrot.slane %v718, 4
        %v720 = vadd.f32 %v718, %v719
        %v721 = vrot.slane %v720, 2
        %v722 = vadd.f32 %v720, %v721
        %v723 = vrot.slane %v722, 1
        %v724 = vadd.f32 %v722, %v723
        %v725 = vrsqrt.pop %v681
        %v726 = vmul.f32 %v681, %v725
        %vm727 = vcmp.eq.f32.partialorder %v681, inf
        %v728 = vsel %vm727, %v681, %v726
        %vm729 = vcmp.eq.f32.partialorder %v681, 0.0
        %v730 = vand.u32 %v681, 2147483648
        %v731 = vsel %vm729, %v730, %v728
        %v732 = vrsqrt.pop %v688
        %v733 = vmul.f32 %v688, %v732
        %vm734 = vcmp.eq.f32.partialorder %v688, inf
        %v735 = vsel %vm734, %v688, %v733
        %vm736 = vcmp.eq.f32.partialorder %v688, 0.0
        %v737 = vand.u32 %v688, 2147483648
        %v738 = vsel %vm736, %v737, %v735
        %v739 = vrsqrt.pop %v699
        %v740 = vmul.f32 %v699, %v739
        %vm741 = vcmp.eq.f32.partialorder %v699, inf
        %v742 = vsel %vm741, %v699, %v740
        %vm743 = vcmp.eq.f32.partialorder %v699, 0.0
        %v744 = vand.u32 %v699, 2147483648
        %v745 = vsel %vm743, %v744, %v742
        %v746 = vrsqrt.pop %v706
        %v747 = vmul.f32 %v706, %v746
        %vm748 = vcmp.eq.f32.partialorder %v706, inf
        %v749 = vsel %vm748, %v706, %v747
        %vm750 = vcmp.eq.f32.partialorder %v706, 0.0
        %v751 = vand.u32 %v706, 2147483648
        %v752 = vsel %vm750, %v751, %v749
        %v753 = vadd.f32 %v731, 1e-08
        %v754 = vadd.f32 %v738, 1e-08
        %v755 = vrcp.pop %v753
        %v756 = vmul.f32 1.0, %v755
        %v757 = vrcp.pop %v754
        %v758 = vmul.f32 1.0, %v757
        %v759 = vadd.f32 %v745, 1e-08
        %v760 = vadd.f32 %v752, 1e-08
        %v761 = vrcp.pop %v759
        %v762 = vmul.f32 1.0, %v761
        %v763 = vrcp.pop %v760
        %v764 = vmul.f32 1.0, %v763
        %v765 = vmul.f32 %v731, %v756
        %v766 = vmul.f32 %v738, %v758
        %v767 = vmul.f32 %v745, %v762
        %v768 = vmul.f32 %v752, %v764
        %v769 = vmul.f32 %v765, %v767
        %v770 = vmul.f32 %v766, %v768
        %v771 = vmul.f32 %v717, %v756
        %v772 = vmul.f32 %v724, %v758
        %v773 = vmul.f32 %v771, %v762
        %v774 = vmul.f32 %v772, %v764
        %v775 = vmax.f32 %v769, 1e-08
        %v776 = vmax.f32 %v770, 1e-08
        %v777 = vrcp.pop %v775
        %v778 = vmul.f32 %v773, %v777
        %v779 = vrcp.pop %v776
        %v780 = vmul.f32 %v774, %v779
        %v781 = vmul.f32 %v569, %v756
        %v782 = vmul.f32 %v570, %v758
        %v783 = vmul.f32 %v571, %v756
        %v784 = vmul.f32 %v572, %v758
        %v785 = vmul.f32 %v778, %v762
        %v786 = vmul.f32 %v780, %v764
        %v787 = vmul.f32 %v785, %v661
        %v788 = vmul.f32 %v786, %v663
        %v789 = vmul.f32 %v785, %v667
        %v790 = vmul.f32 %v786, %v669
        %v791 = vadd.f32 %v781, %v787
        %v792 = vadd.f32 %v782, %v788
        %v793 = vadd.f32 %v783, %v789
        %v794 = vadd.f32 %v784, %v790
        %v795 = vld [vmem:[%s6] sm:$0xff]
        %v796 = vld [vmem:[%s7] sm:$0xff]
        %798 = vset.pattern.permute.xlu0 0
        %799 = vperm.xlu0 %798, %v796
        %v800 = vpop.permute.xlu0 %799
        %v803 = vsel %vm587, %v795, 0
        %805 = vmatprep.subr.mxu0 0.0
        %806 = vmatpush1.msra.mxu0 0.0
        %807 = vmatprep.subr.mxu0 0.0
        %808 = vmatpush1.msra.mxu0 0.0
        %809 = vmatprep.subr.mxu0 0.0
        %810 = vmatpush1.msra.mxu0 0.0
        %811 = vmatprep.subr.mxu0 0.0
        %812 = vmatpush1.msra.mxu0 0.0
        %813 = vmatprep.subr.mxu0 0.0
        %814 = vmatpush1.msra.mxu0 0.0
        %815 = vmatprep.subr.mxu0 0.0
        %816 = vmatpush1.msra.mxu0 0.0
        %817 = vmatprep.subr.mxu0 0.0
        %818 = vmatpush1.msra.mxu0 0.0
        %819 = vmatprep.subr.mxu0 0.0
        %820 = vmatpush1.msra.mxu0 0.0
        %821 = vmatprep.subr.mxu0 0.0
        %822 = vmatpush1.msra.mxu0 0.0
        %823 = vmatprep.subr.mxu0 0.0
        %824 = vmatpush1.msra.mxu0 0.0
        %825 = vmatprep.subr.mxu0 0.0
        %826 = vmatpush1.msra.mxu0 0.0
        %827 = vmatprep.subr.mxu0 0.0
        %828 = vmatpush1.msra.mxu0 0.0
        %829 = vmatprep.subr.mxu0 0.0
        %830 = vmatpush1.msra.mxu0 0.0
        %831 = vmatprep.subr.mxu0 0.0
        %832 = vmatpush1.msra.mxu0 0.0
        %833 = vmatprep.subr.mxu0 %v794
        %834 = vmatpush1.msra.mxu0 %v793
        %835 = vmatprep.subr.mxu0 %v792
        %836 = vmatpush1.msra.mxu0 %v791
        %837 = vmatprep.subr.mxu0 0.0
        %838 = vmatpush2.msra.mxu0 0.0
        %839 = vmatprep.subr.mxu0 0.0
        %840 = vmatpush2.msra.mxu0 0.0
        %841 = vmatprep.subr.mxu0 0.0
        %842 = vmatpush2.msra.mxu0 0.0
        %843 = vmatprep.subr.mxu0 0.0
        %844 = vmatpush2.msra.mxu0 0.0
        %845 = vmatprep.subr.mxu0 0.0
        %846 = vmatpush2.msra.mxu0 0.0
        %847 = vmatprep.subr.mxu0 0.0
        %848 = vmatpush2.msra.mxu0 0.0
        %849 = vmatprep.subr.mxu0 0.0
        %850 = vmatpush2.msra.mxu0 0.0
        %851 = vmatprep.subr.mxu0 0.0
        %852 = vmatpush2.msra.mxu0 0.0
        %853 = vmatprep.subr.mxu0 0.0
        %854 = vmatpush2.msra.mxu0 0.0
        %855 = vmatprep.subr.mxu0 0.0
        %856 = vmatpush2.msra.mxu0 0.0
        %857 = vmatprep.subr.mxu0 0.0
        %858 = vmatpush2.msra.mxu0 0.0
        %859 = vmatprep.subr.mxu0 0.0
        %860 = vmatpush2.msra.mxu0 0.0
        %861 = vmatprep.subr.mxu0 0.0
        %862 = vmatpush2.msra.mxu0 0.0
        %863 = vmatprep.subr.mxu0 0.0
        %864 = vmatpush2.msra.mxu0 0.0
        %865 = vmatprep.subr.mxu0 0.0
        %866 = vmatpush2.msra.mxu0 0.0
        %867 = vmatprep.subr.mxu0 0.0
        %868 = vmatpush2.msra.mxu0 0.0
        %869 = vmatprep.mubr.f32.mxu0 0.0
        %870 = vmatmul.mubr.f32.gmra.mxu0 %v803
        %v871 = vpop.f32.mrf.mxu0
        %v872 = vadd.f32 %v800, %v871
        %v873 = vpop.f32.mrf.mxu0
        %v874 = vadd.f32 %v800, %v873
        %875 = vdwg.mxu0
        %v876 = vmax.f32 %v872, 0.0
        %v877 = vmax.f32 %v874, 0.0
        %v878 = vld [vmem:[%s8] sm:$0xff]
        %v879 = vld [vmem:[%s8 + $0x8] sm:$0xff]
        %v880 = vld [vmem:[%s8 + $0x10] sm:$0xff]
        %v881 = vld [vmem:[%s8 + $0x18] sm:$0xff]
        %v883 = vsel %vm437, %v878, 0
        %v886 = vsel %vm437, %v879, 0
        %v889 = vsel %vm437, %v880, 0
        %v892 = vsel %vm437, %v881, 0
        %894 = vmatprep.subr.mxu0 0.0
        %895 = vmatpush1.msra.mxu0 0.0
        %896 = vmatprep.subr.mxu0 0.0
        %897 = vmatpush1.msra.mxu0 0.0
        %898 = vmatprep.subr.mxu0 0.0
        %899 = vmatpush1.msra.mxu0 0.0
        %900 = vmatprep.subr.mxu0 0.0
        %901 = vmatpush1.msra.mxu0 0.0
        %902 = vmatprep.subr.mxu0 0.0
        %903 = vmatpush1.msra.mxu0 0.0
        %904 = vmatprep.subr.mxu0 0.0
        %905 = vmatpush1.msra.mxu0 0.0
        %906 = vmatprep.subr.mxu0 0.0
        %907 = vmatpush1.msra.mxu0 0.0
        %908 = vmatprep.subr.mxu0 0.0
        %909 = vmatpush1.msra.mxu0 0.0
        %910 = vmatprep.subr.mxu0 0.0
        %911 = vmatpush1.msra.mxu0 0.0
        %912 = vmatprep.subr.mxu0 0.0
        %913 = vmatpush1.msra.mxu0 0.0
        %914 = vmatprep.subr.mxu0 0.0
        %915 = vmatpush1.msra.mxu0 0.0
        %916 = vmatprep.subr.mxu0 0.0
        %917 = vmatpush1.msra.mxu0 0.0
        %918 = vmatprep.subr.mxu0 0.0
        %919 = vmatpush1.msra.mxu0 0.0
        %920 = vmatprep.subr.mxu0 0.0
        %921 = vmatpush1.msra.mxu0 0.0
        %922 = vmatprep.subr.mxu0 0.0
        %923 = vmatpush1.msra.mxu0 0.0
        %924 = vmatprep.subr.mxu0 %v877
        %925 = vmatpush1.msra.mxu0 %v876
        %926 = vmatprep.subr.mxu0 0.0
        %927 = vmatpush2.msra.mxu0 0.0
        %928 = vmatprep.subr.mxu0 0.0
        %929 = vmatpush2.msra.mxu0 0.0
        %930 = vmatprep.subr.mxu0 0.0
        %931 = vmatpush2.msra.mxu0 0.0
        %932 = vmatprep.subr.mxu0 0.0
        %933 = vmatpush2.msra.mxu0 0.0
        %934 = vmatprep.subr.mxu0 0.0
        %935 = vmatpush2.msra.mxu0 0.0
        %936 = vmatprep.subr.mxu0 0.0
        %937 = vmatpush2.msra.mxu0 0.0
        %938 = vmatprep.subr.mxu0 0.0
        %939 = vmatpush2.msra.mxu0 0.0
        %940 = vmatprep.subr.mxu0 0.0
        %941 = vmatpush2.msra.mxu0 0.0
        %942 = vmatprep.subr.mxu0 0.0
        %943 = vmatpush2.msra.mxu0 0.0
        %944 = vmatprep.subr.mxu0 0.0
        %945 = vmatpush2.msra.mxu0 0.0
        %946 = vmatprep.subr.mxu0 0.0
        %947 = vmatpush2.msra.mxu0 0.0
        %948 = vmatprep.subr.mxu0 0.0
        %949 = vmatpush2.msra.mxu0 0.0
        %950 = vmatprep.subr.mxu0 0.0
        %951 = vmatpush2.msra.mxu0 0.0
        %952 = vmatprep.subr.mxu0 0.0
        %953 = vmatpush2.msra.mxu0 0.0
        %954 = vmatprep.subr.mxu0 0.0
        %955 = vmatpush2.msra.mxu0 0.0
        %956 = vmatprep.subr.mxu0 0.0
        %957 = vmatpush2.msra.mxu0 0.0
        %958 = vmatprep.mubr.f32.mxu0 0.0
        %959 = vmatmul.mubr.f32.gmra.mxu0 %v883
        %v960 = vpop.f32.mrf.mxu0
        %v961 = vadd.f32 0.0, %v960
        %v962 = vpop.f32.mrf.mxu0
        %v963 = vadd.f32 0.0, %v962
        %964 = vmatprep.mubr.f32.mxu0 0.0
        %965 = vmatmul.mubr.f32.gmra.mxu0 %v886
        %v966 = vpop.f32.mrf.mxu0
        %v967 = vadd.f32 0.0, %v966
        %v968 = vpop.f32.mrf.mxu0
        %v969 = vadd.f32 0.0, %v968
        %970 = vmatprep.mubr.f32.mxu0 0.0
        %971 = vmatmul.mubr.f32.gmra.mxu0 %v889
        %v972 = vpop.f32.mrf.mxu0
        %v973 = vadd.f32 0.0, %v972
        %v974 = vpop.f32.mrf.mxu0
        %v975 = vadd.f32 0.0, %v974
        %976 = vmatprep.mubr.f32.mxu0 0.0
        %977 = vmatmul.mubr.f32.gmra.mxu0 %v892
        %v978 = vpop.f32.mrf.mxu0
        %v979 = vadd.f32 0.0, %v978
        %v980 = vpop.f32.mrf.mxu0
        %v981 = vadd.f32 0.0, %v980
        %982 = vdwg.mxu0
        %v983 = vadd.f32 %v535, %v961
        %v984 = vadd.f32 %v537, %v963
        %v985 = vadd.f32 %v541, %v967
        %v986 = vadd.f32 %v543, %v969
        %v987 = vadd.f32 %v547, %v973
        %v988 = vadd.f32 %v549, %v975
        %v989 = vadd.f32 %v553, %v979
        %v990 = vadd.f32 %v555, %v981
        %v991 = vld [vmem:[%s9] sm:$0xff]
        %v992 = vld [vmem:[%s9 + $0x8] sm:$0xff]
        %v993 = vld [vmem:[%s9 + $0x10] sm:$0xff]
        %v994 = vld [vmem:[%s9 + $0x18] sm:$0xff]
        %996 = vset.pattern.permute.xlu0 0
        %997 = vperm.xlu0 %996, %v991
        %v998 = vpop.permute.xlu0 %997
        %1001 = vset.pattern.permute.xlu0 0
        %1002 = vperm.xlu0 %1001, %v992
        %v1003 = vpop.permute.xlu0 %1002
        %1006 = vset.pattern.permute.xlu0 0
        %1007 = vperm.xlu0 %1006, %v993
        %v1008 = vpop.permute.xlu0 %1007
        %1011 = vset.pattern.permute.xlu0 0
        %1012 = vperm.xlu0 %1011, %v994
        %v1013 = vpop.permute.xlu0 %1012
        %v1015 = vadd.f32 %v983, %v998
        %v1016 = vadd.f32 %v984, %v998
        %v1017 = vadd.f32 %v985, %v1003
        %v1018 = vadd.f32 %v986, %v1003
        %v1019 = vadd.f32 %v987, %v1008
        %v1020 = vadd.f32 %v988, %v1008
        %v1021 = vadd.f32 %v989, %v1013
        %v1022 = vadd.f32 %v990, %v1013
        %v1023 = vmax.f32 %v1015, 0.0
        %v1024 = vmax.f32 %v1016, 0.0
        %v1025 = vmax.f32 %v1017, 0.0
        %v1026 = vmax.f32 %v1018, 0.0
        %v1027 = vmax.f32 %v1019, 0.0
        %v1028 = vmax.f32 %v1020, 0.0
        %v1029 = vmax.f32 %v1021, 0.0
        %v1030 = vmax.f32 %v1022, 0.0
        %1031 = vst [vmem:[%s403] sm:$0xff] %v1023
        %1032 = vst [vmem:[%s403 + $0x8] sm:$0xff] %v1024
        %1033 = vst [vmem:[%s403 + $0x10] sm:$0xff] %v1025
        %1034 = vst [vmem:[%s403 + $0x18] sm:$0xff] %v1026
        %1035 = vst [vmem:[%s403 + $0x20] sm:$0xff] %v1027
        %1036 = vst [vmem:[%s403 + $0x28] sm:$0xff] %v1028
        %1037 = vst [vmem:[%s403 + $0x30] sm:$0xff] %v1029
        %1038 = vst [vmem:[%s403 + $0x38] sm:$0xff] %v1030
        %s1039 = sand.u32 %s270, 1
        %s1040 = scalar_lea.sflag [#allocation3], %s1039
        %s1041 = sand.u32 %s270, 1
        %s1042 = smul.addr %s1041, 64
        %s1043 = scalar_lea.vmem [#allocation2], %s1042
        // Predicated region
        $region61: #{tpu_custom_call.1} parent=59 // pred_check
          %p1044 = pneg %p280
        $region62: #{tpu_custom_call.1} parent=59 // pred_check_branch
          %1046 = sbr.rel (%p1044) target = $region64
        $region63: #{tpu_custom_call.1} parent=59 // pred_region
          %s1047 = smul.u32 2, %s29
          %s1049 = ssub.s32 1024, 1024
          %1050 = vsyncadd %s1040, %s1049
          %s1051 = smul.addr %s28, 8
          %s1052 = sadd.s32 %s1047, %s1051
          %s1053 = smul.addr %s1052, 128
          %s1054 = scalar_lea.hbm %s10, %s1053
          %s1055 = sshll.u32 %s1043, 4
          %s1056 = int_to_ptr.vmem [resolvable:$true] %s1055
          %1061 = dma.vmem_to_hbm [thread:$0]  %s1056, 1024, %s1054, %s1040, 256, 256, 16
        $region64: #{tpu_custom_call.1} parent=59 // pred_fallthru
          _
      $region60: #{tpu_custom_call.1} parent=5 // pred_fallthru
        _
      %p1062 = scmp.le.s32.totalorder 2, %s19
      // Predicated region
      $region65: #{tpu_custom_call.1} parent=5 // pred_check
        %p1063 = pneg %p1062
      $region66: #{tpu_custom_call.1} parent=5 // pred_check_branch
        %1065 = sbr.rel (%p1063) target = $region68
      $region67: #{tpu_custom_call.1} parent=5 // pred_region
        %s1066 = ssub.s32 %s19, 2
        // Predicated region
        $region69: #{tpu_custom_call.1} parent=67 // pred_check
          %p1067 = pneg %p286
        $region70: #{tpu_custom_call.1} parent=67 // pred_check_branch
          %1069 = sbr.rel (%p1067) target = $region72
        $region71: #{tpu_custom_call.1} parent=67 // pred_region
          %s1070 = sand.u32 %s271, 1
          %s1071 = scalar_lea.sflag [#allocation3], %s1070
          %s1072 = sand.u32 %s271, 1
          %s1073 = smul.addr %s1072, 64
          %s1074 = scalar_lea.vmem [#allocation2], %s1073
          %1075 = dma.done %s1071, 1024
        $region72: #{tpu_custom_call.1} parent=67 // pred_fallthru
          _
      $region68: #{tpu_custom_call.1} parent=5 // pred_fallthru
        _
    $region6: #{tpu_custom_call.1} parent=1 // loop_footer
      %s23 = sadd.s32 1, %s19
    $region7: #{tpu_custom_call.1} parent=1 // loop_footer_branch
      %18 = sbr.rel target = $region3
    $region8: #{tpu_custom_call.1} parent=1 // loop_exit
      _
    %1076 = vsyncpa [#allocation3], 1
    %s1077 = scalar_lea.sflag [#allocation3], 1
    %1078 = vsyncpa %s1077, 1

</llo_original>
